<compile_context>
chip_gen: v7x
topology: tpu7x:2x2x1
jax: 0.10.0
libtpu: 0.0.40
codegen_flags: <defaults>
</compile_context>

<pallas_src>
import functools

import jax
import jax.numpy as jnp
from jax.experimental import pallas as pl
from jax.experimental.pallas import tpu as pltpu


_LANES = 128
_DEFAULT_BLOCK_M = 32768     # lanes per grid step: (8, 32768) f32 = 1 MiB input block
_MIN_PALLAS_ROWS = 1024      # below this, a pallas_call launch dwarfs the compute


def _cdiv(a, b):
    return -(-a // b)


def _round_up(x, m):
    return _cdiv(x, m) * m


def _pick_tiling(m, block_m):
    """Near-equal lane-aligned tiles; >=2 grid steps when possible (v7x 2-TC sharding)."""
    m128 = _round_up(m, _LANES)
    nb = _cdiv(m128, block_m)
    if m128 >= 2 * _LANES:
        nb = max(nb, 2)                       # let ("parallel",) split M across both TCs
    tm = _round_up(_cdiv(m128, nb), _LANES)   # lane-aligned, near-equal tiles
    grid = _cdiv(m, tm)                       # partial last block instead of over-padding
    return tm, grid


# ------------------------------------------------------------------------------------
# Kernel 1: lane-dense bias-free linear layer, pure VPU + XLU (no MXU).
#   at_ref : (K, TM) VMEM  -- A^T block, collocation points on lanes (full occupancy)
#   wt_ref : (K, N)  VMEM  -- weight column(s), resident for the whole grid
#   o_ref  : (N, TM) VMEM  -- lane-dense output block
#   out[n, :] = sum_k at[k, :] * wt[k, n]   (dense vmul + sublane reduce)
# ------------------------------------------------------------------------------------
def _lane_linear_kernel(at_ref, wt_ref, o_ref):
    at = at_ref[...].astype(jnp.float32)                  # (K, TM)
    wt = wt_ref[...].astype(jnp.float32)                  # (K, N)
    n_out = o_ref.shape[0]
    for n in range(n_out):                                # N (=1): static unroll
        prod = at * wt[:, n:n + 1]                        # full-occupancy VPU mul
        o_ref[n:n + 1, :] = jnp.sum(prod, axis=0, keepdims=True).astype(o_ref.dtype)


# ------------------------------------------------------------------------------------
# Kernel 2: fused test_x forward for the parametric basis P_k(x) = tanh(a_k x + b_k).
#   out[n, :] = sum_k w[n, k] * tanh(a[k] * x[:] + b[k])
#   x_ref  : (1, TM) VMEM  -- collocation points, lane-dense
#   wt_ref : (K, N)  VMEM ;  a_ref, b_ref : (K, 1) VMEM
#   o_ref  : (N, TM) VMEM
# Dense (K, TM) tanh -> EUP runs at full vreg occupancy.
# ------------------------------------------------------------------------------------
def _fused_basis_linear_kernel(x_ref, wt_ref, a_ref, b_ref, o_ref):
    x = x_ref[...].astype(jnp.float32)                    # (1, TM)
    a = a_ref[...].astype(jnp.float32)                    # (K, 1)
    b = b_ref[...].astype(jnp.float32)                    # (K, 1)
    wt = wt_ref[...].astype(jnp.float32)                  # (K, N)
    k = a.shape[0]
    xb = jnp.broadcast_to(x, (k, x.shape[1]))             # sublane broadcast (K, TM)
    p = jnp.tanh(a * xb + b)                               # dense EUP tanh over (K, TM)
    n_out = o_ref.shape[0]
    for n in range(n_out):
        prod = p * wt[:, n:n + 1]                          # VPU
        o_ref[n:n + 1, :] = jnp.sum(prod, axis=0, keepdims=True).astype(o_ref.dtype)


# ------------------------------------------------------------------------------------
# Wrappers
# ------------------------------------------------------------------------------------
@functools.partial(jax.jit, static_argnames=("block_m",))
def rebano_linear_t(at, w, block_m=_DEFAULT_BLOCK_M):
    """out = A @ w.T given A^T (no wrapper transpose/pad of the big operand).

    at : (K, M) transposed activation matrix, w : (N, K) weight.  Returns (M, N).
    """
    k, m = at.shape
    n = w.shape[0]
    if m < _MIN_PALLAS_ROWS:
        # Tiny system: a pallas_call launch costs far more than the compute.
        return (w @ at).T

    tm, grid = _pick_tiling(m, block_m)
    wt = w.T.reshape(k, n)                                 # tiny (K, N) column, free-ish
    out_t = pl.pallas_call(
        _lane_linear_kernel,
        out_shape=jax.ShapeDtypeStruct((n, m), at.dtype),
        grid=(grid,),
        in_specs=[
            pl.BlockSpec((k, tm), lambda i: (0, i)),
            pl.BlockSpec(memory_space=pltpu.MemorySpace.VMEM),   # whole weight, resident
        ],
        out_specs=pl.BlockSpec((n, tm), lambda i: (0, i)),
        compiler_params=pltpu.CompilerParams(dimension_semantics=("parallel",)),
    )(at, wt)
    return out_t.T                                         # (M, N); for N=1 this is a reshape


def rebano_linear(a, w, block_m=_DEFAULT_BLOCK_M):
    """Compat wrapper for caller-provided (M, K) activations (boundary matrix, lossD)."""
    if a.shape[0] < _MIN_PALLAS_ROWS:
        return a @ w.T
    # TODO(synk): caller-provided (M, K) layout still costs one transpose pass here;
    # prefer rebano_linear_t with data stored transposed.
    return rebano_linear_t(a.T, w, block_m=block_m)


@functools.partial(jax.jit, static_argnames=("block_m",))
def rebano_fused_basis_forward(x, w, a_coef, b_coef, block_m=_DEFAULT_BLOCK_M):
    """test_x forward with the tanh basis fused into the kernel (no HBM activation matrix).

    x : (M, 1) collocation points, w : (N, K), a_coef/b_coef : (K,).  Returns (M, N).
    """
    m = x.shape[0]
    k = a_coef.shape[0]
    n = w.shape[0]
    if m < _MIN_PALLAS_ROWS:
        a = jnp.tanh(x * a_coef[None, :] + b_coef[None, :])   # (M, K)
        return a @ w.T

    tm, grid = _pick_tiling(m, block_m)
    xt = x.reshape(1, m)                                   # (M,1) -> (1,M): pure reshape
    wt = w.T.reshape(k, n)
    a_col = a_coef.reshape(k, 1)
    b_col = b_coef.reshape(k, 1)
    out_t = pl.pallas_call(
        _fused_basis_linear_kernel,
        out_shape=jax.ShapeDtypeStruct((n, m), x.dtype),
        grid=(grid,),
        in_specs=[
            pl.BlockSpec((1, tm), lambda i: (0, i)),
            pl.BlockSpec(memory_space=pltpu.MemorySpace.VMEM),
            pl.BlockSpec(memory_space=pltpu.MemorySpace.VMEM),
            pl.BlockSpec(memory_space=pltpu.MemorySpace.VMEM),
        ],
        out_specs=pl.BlockSpec((n, tm), lambda i: (0, i)),
        compiler_params=pltpu.CompilerParams(dimension_semantics=("parallel",)),
    )(xt, wt, a_col, b_col)
    return out_t.T


# ------------------------------------------------------------------------------------
# ReBaNO module (JAX) — parameters / precomputed activations held as arrays.
# ------------------------------------------------------------------------------------
class ReBaNO:
    """ReBaNO of 1d Poisson equation (forward / losses)."""

    def __init__(self, layers, P, initial_c, BC_u, f_hat,
                 activation_resid, activation_BC, Pxx, basis_params=None):
        self.layers = layers                      # [1, n_basis, n_out]
        self.activation = P                       # list of callables P_i(x): (M,1) -> (M,1)
        self.weight = initial_c                   # (layers[2], layers[1])
        self.BC_u = BC_u
        self.f_hat = f_hat
        self.activation_BC = activation_BC        # (n_bc, layers[1])  -- tiny, plain JAX path
        # One-time transposes at construction: the kernels consume A^T = (K, M) directly,
        # eliminating the per-call transpose+pad HBM pass flagged by the perf review.
        self.activation_resid_T = jnp.asarray(activation_resid).T   # (K, n_resid)
        self.Pxx_T = jnp.asarray(Pxx).T                             # (K, n_resid)
        # If the basis is the parametric family P_i(x) = tanh(a_i x + b_i), the test_x
        # forward is fully fused into a single Pallas kernel.
        self.basis_params = basis_params          # (a_coef, b_coef) or None

    def forward(self, datatype=None, test_x=None):
        if test_x is not None:
            if self.basis_params is not None:
                a_coef, b_coef = self.basis_params
                return rebano_fused_basis_forward(test_x, self.weight, a_coef, b_coef)
            # TODO(synk): general ReBaNO basis functions are arbitrary pre-trained PINNs;
            # they cannot be fused generically, so they are evaluated in plain JAX.  The
            # axis-0 concat builds A^T directly (no transpose pass) for the Pallas kernel.
            rows = [self.activation[i](test_x).reshape(1, -1) for i in range(self.layers[1])]
            at = jnp.concatenate(rows, axis=0)             # (K, M)
            return rebano_linear_t(at, self.weight)
        if datatype == "residual":
            return rebano_linear_t(self.activation_resid_T, self.weight)
        if datatype == "boundary":
            return rebano_linear(self.activation_BC, self.weight)

    def lossR(self):
        f = rebano_linear_t(self.Pxx_T, self.weight)
        return jnp.mean((f - (-self.f_hat)) ** 2)

    def lossBC(self):
        return jnp.mean((self.forward(datatype="boundary") - self.BC_u) ** 2)

    def lossD(self, u_pinn, u):
        u_pred = rebano_linear(u_pinn, self.weight).reshape(u.shape)
        return jnp.linalg.norm(u_pred - u) / jnp.linalg.norm(u)

    def loss(self):
        return self.lossR() + self.lossBC()


# ------------------------------------------------------------------------------------
# Driver: deterministic synthetic inputs at small shapes (large enough to hit Pallas).
# ------------------------------------------------------------------------------------
if __name__ == "__main__":
    key = jax.random.PRNGKey(0)
    k1, k2, k3 = jax.random.split(key, 3)

    n_neurons = 8                       # layers[1] : number of basis PINNs
    layers = [1, n_neurons, 1]
    n_resid = 2048                      # residual collocation points (2 grid steps)
    n_test = 1500                       # test points (exercises partial last block)
    dtype = jnp.float32

    # Synthetic basis "PINNs": P_i(x) = tanh(a_i x + b_i) (canonical PINN activation,
    # maps directly onto the TPU EUP).  Coefficients are exact f32 values.
    a_list = [0.5 * (i + 1) for i in range(n_neurons)]           # 0.5 .. 4.0
    b_list = [-0.5 + 0.125 * i for i in range(n_neurons)]        # -0.5 .. 0.375
    a_coef = jnp.array(a_list, dtype=dtype)
    b_coef = jnp.array(b_list, dtype=dtype)

    def make_basis(i):
        ai, bi = a_list[i], b_list[i]
        return lambda x: jnp.tanh(ai * x + bi)

    P = [make_basis(i) for i in range(n_neurons)]

    # Collocation grids.
    x_resid = jnp.linspace(0.0, 1.0, n_resid, dtype=dtype).reshape(-1, 1)
    x_bc = jnp.array([[0.0], [1.0]], dtype=dtype)

    # Precomputed activation matrices (as the PyTorch module receives them: (M, K)).
    activation_resid = jnp.concatenate([P[i](x_resid) for i in range(n_neurons)], axis=1)
    activation_BC = jnp.concatenate([P[i](x_bc) for i in range(n_neurons)], axis=1)

    # Second derivatives: d2/dx2 tanh(a x + b) = -2 a^2 t (1 - t^2),  t = tanh(a x + b).
    def basis_xx(i):
        t = P[i](x_resid)
        return -2.0 * (a_list[i] ** 2) * t * (1.0 - t ** 2)

    Pxx = jnp.concatenate([basis_xx(i) for i in range(n_neurons)], axis=1).astype(dtype)

    # Deterministic weights / targets.
    initial_c = jax.random.normal(k1, (layers[2], layers[1]), dtype=dtype) * 0.1
    BC_u = jnp.zeros((2, layers[2]), dtype=dtype)
    f_hat = jax.random.normal(k2, (n_resid, layers[2]), dtype=dtype)
    test_x = jax.random.uniform(k3, (n_test, 1), dtype=dtype)

    model = ReBaNO(layers, P, initial_c, BC_u, f_hat,
                   activation_resid, activation_BC, Pxx,
                   basis_params=(a_coef, b_coef))

    out_test = model.forward(test_x=test_x)          # fused dense-tanh Pallas kernel
    out_resid = model.forward(datatype="residual")   # lane-dense VPU+XLU Pallas kernel
    out_bc = model.forward(datatype="boundary")      # tiny 2x8 -> plain JAX (per review)
    total_loss = model.loss()
    data_loss = model.lossD(activation_resid, activation_resid @ initial_c.T)

    # Also exercise the general (non-fused) test_x path through the Pallas linear kernel.
    model_general = ReBaNO(layers, P, initial_c, BC_u, f_hat,
                           activation_resid, activation_BC, Pxx, basis_params=None)
    out_test_general = model_general.forward(test_x=test_x)

    jax.block_until_ready((out_test, out_resid, out_bc, total_loss,
                           data_loss, out_test_general))

    # Correctness checks against a plain-JAX (elementwise multiply + reduce) reference.
    def ref_linear(a, w):
        return jnp.sum(a[:, None, :] * w[None, :, :], axis=-1)

    a_test = jnp.concatenate([P[i](test_x) for i in range(n_neurons)], axis=1)
    ref_test = ref_linear(a_test, initial_c)
    ref_resid = ref_linear(activation_resid, initial_c)
    ref_bc = ref_linear(activation_BC, initial_c)

    assert out_test.shape == (n_test, 1)
    assert out_resid.shape == (n_resid, 1)
    assert out_bc.shape == (2, 1)
    # Fused path: in-kernel EUP tanh vs XLA tanh -> slightly looser tolerance (documented).
    assert jnp.allclose(out_test, ref_test, atol=1e-4)
    assert jnp.allclose(out_test_general, ref_test, atol=1e-5)
    assert jnp.allclose(out_resid, ref_resid, atol=1e-5)
    assert jnp.allclose(out_bc, ref_bc, atol=1e-4)
    assert bool(jnp.isfinite(total_loss))
    assert bool(jnp.isfinite(data_loss))

    print("KERNEL_OK")
</pallas_src>

<mosaic_0001>
module attributes {stable_mosaic.version = 11 : i64} {
  func.func @_fused_basis_linear_kernel(%arg0: i32, %arg1: memref<1x768xf32, #tpu.memory_space<vmem>>, %arg2: memref<8x1xf32, #tpu.memory_space<vmem>>, %arg3: memref<8x1xf32, #tpu.memory_space<vmem>>, %arg4: memref<8x1xf32, #tpu.memory_space<vmem>>, %arg5: memref<1x768xf32, #tpu.memory_space<vmem>>) attributes {dimension_semantics = [#tpu.dimension_semantics<parallel>], iteration_bounds = array<i64: 2>, scalar_prefetch = 0 : i64, scratch_operands = 0 : i64, tpu.core_type = #tpu.core_type<tc>, window_params = [{transform_indices = @transform_0, window_bounds = array<i64: 1, 768>}, {pipeline_mode = #tpu.pipeline_mode<synchronous>, transform_indices = @transform_1, window_bounds = array<i64: 8, 1>}, {pipeline_mode = #tpu.pipeline_mode<synchronous>, transform_indices = @transform_2, window_bounds = array<i64: 8, 1>}, {pipeline_mode = #tpu.pipeline_mode<synchronous>, transform_indices = @transform_3, window_bounds = array<i64: 8, 1>}, {transform_indices = @transform_4, window_bounds = array<i64: 1, 768>}]} {
    %c0 = arith.constant 0 : index
    %c0_0 = arith.constant 0 : index
    %0 = vector.load %arg1[%c0, %c0_0] : memref<1x768xf32, #tpu.memory_space<vmem>>, vector<1x768xf32>
    %c0_1 = arith.constant 0 : index
    %c0_2 = arith.constant 0 : index
    %1 = vector.load %arg3[%c0_1, %c0_2] : memref<8x1xf32, #tpu.memory_space<vmem>>, vector<8x1xf32>
    %c0_3 = arith.constant 0 : index
    %c0_4 = arith.constant 0 : index
    %2 = vector.load %arg4[%c0_3, %c0_4] : memref<8x1xf32, #tpu.memory_space<vmem>>, vector<8x1xf32>
    %c0_5 = arith.constant 0 : index
    %c0_6 = arith.constant 0 : index
    %3 = vector.load %arg2[%c0_5, %c0_6] : memref<8x1xf32, #tpu.memory_space<vmem>>, vector<8x1xf32>
    %4 = vector.shape_cast %0 : vector<1x768xf32> to vector<1x768xf32>
    %5 = vector.broadcast %4 : vector<1x768xf32> to vector<8x768xf32>
    %6 = vector.broadcast %1 : vector<8x1xf32> to vector<8x768xf32>
    %7 = arith.mulf %6, %5 : vector<8x768xf32>
    %8 = vector.broadcast %2 : vector<8x1xf32> to vector<8x768xf32>
    %9 = arith.addf %7, %8 : vector<8x768xf32>
    %10 = math.tanh %9 : vector<8x768xf32>
    %11 = vector.broadcast %3 : vector<8x1xf32> to vector<8x768xf32>
    %12 = arith.mulf %10, %11 : vector<8x768xf32>
    %cst = arith.constant dense<0.000000e+00> : vector<768xf32>
    %13 = vector.multi_reduction <add>, %12, %cst [0] : vector<8x768xf32> to vector<768xf32>
    %14 = vector.shape_cast %13 : vector<768xf32> to vector<1x768xf32>
    %c0_7 = arith.constant 0 : index
    %c0_8 = arith.constant 0 : index
    %15 = vector.load %arg5[%c0_7, %c0_8] : memref<1x768xf32, #tpu.memory_space<vmem>>, vector<1x768xf32>
    tpu.vector_store %arg5[%c0_7, %c0_8], %14 {strides = array<i32>} : memref<1x768xf32, #tpu.memory_space<vmem>>, vector<1x768xf32>,
    return
  }
  func.func @transform_0(%arg0: i32) -> (i32, i32) {
    %c0_i32 = arith.constant 0 : i32
    %c0_i32_0 = arith.constant 0 : i32
    return %c0_i32, %arg0 : i32, i32
  }
  func.func @transform_1(%arg0: i32) -> (i32, i32) {
    %c0_i32 = arith.constant 0 : i32
    %c0_i32_0 = arith.constant 0 : i32
    %c0_i32_1 = arith.constant 0 : i32
    return %c0_i32, %c0_i32_0 : i32, i32
  }
  func.func @transform_2(%arg0: i32) -> (i32, i32) {
    %c0_i32 = arith.constant 0 : i32
    %c0_i32_0 = arith.constant 0 : i32
    %c0_i32_1 = arith.constant 0 : i32
    return %c0_i32, %c0_i32_0 : i32, i32
  }
  func.func @transform_3(%arg0: i32) -> (i32, i32) {
    %c0_i32 = arith.constant 0 : i32
    %c0_i32_0 = arith.constant 0 : i32
    %c0_i32_1 = arith.constant 0 : i32
    return %c0_i32, %c0_i32_0 : i32, i32
  }
  func.func @transform_4(%arg0: i32) -> (i32, i32) {
    %c0_i32 = arith.constant 0 : i32
    %c0_i32_0 = arith.constant 0 : i32
    return %c0_i32, %arg0 : i32, i32
  }
}

</mosaic_0001>

<llo_original>
// kernel: rebano_fused_basis_forward.1
$region0: #{rebano_fused_basis_forward.1}
  #allocation0 [shape = 'u32[]', space=smem, size = 0x4, offset = 0x4, fixed_abs, tag = 'smem constant byte address 0x4 - core index']
  #allocation1 [shape = 'u32[144,128]{1,0:T(1,128)}', space=vmem, size = 0x12000, scoped, tag = 'internal scratch']
  %s0 = inlined_call_operand.vmem [shape: f32[1,1500], index: 0, kind: input, shape index: {}]
  %s1 = inlined_call_operand.vmem [shape: f32[8,1], index: 1, kind: input, shape index: {}]
  %s2 = inlined_call_operand.vmem [shape: f32[8,1], index: 2, kind: input, shape index: {}]
  %s3 = inlined_call_operand.vmem [shape: f32[8,1], index: 3, kind: input, shape index: {}]
  %s4 = inlined_call_operand.hbm [shape: f32[1,1500], index: 4, kind: output, shape index: {}]
  %s5 = sld [smem:[#allocation0]]
  $region49: #{rebano_fused_basis_forward.1} parent=0
    _
  %s7 = ssub.s32 1, %s5
  %s8 = scalar_select 0, %s7, %s5
  $region1: #{rebano_fused_basis_forward.1} parent=0
    #allocation2 [shape = 'u8[6144]{0}', space=vmem, size = 0x1800, scoped, tag = 'output window, operand 0']
    #allocation3 [shape = 's32[2]{0}', space=sflag, size = 0x8, scoped, tag = 'scoped memory for rebano_fused_basis_forward.1']
    %9 = vsyncpa [#allocation3], 0
    %s10 = scalar_lea.sflag [#allocation3], 1
    %11 = vsyncpa %s10, 0
    loop: start=0, step=1, limit=4
    $region2: #{rebano_fused_basis_forward.1} parent=1 // loop_pre_header
      _
    $region3: #{rebano_fused_basis_forward.1} parent=1 // loop_header
      %s13 = sphi 0, %s17
      %p14 = scmp.ge.s32.totalorder %s13, 4
      %s23 = sphi 0, %s25
      %s26 = sphi 0, %s23
      %s27 = sphi 0, %s26
      %s43 = sphi 0, %s27
      %s47 = sphi 0, %s47
      %s49 = sphi 0, %s47
      %s50 = sphi 0, %s49
      %s64 = sphi 0, %s50
      %s68 = sphi 0, %s68
      %s70 = sphi 0, %s68
      %s71 = sphi 0, %s70
      %s85 = sphi 0, %s71
      %s89 = sphi 0, %s89
      %s91 = sphi 0, %s89
      %s92 = sphi 0, %s91
      %s106 = sphi 0, %s92
      %s112 = sphi 0, %s114
      %s115 = sphi 0, %s112
      %s116 = sphi 0, %s115
      %s132 = sphi 0, %s116
    $region4: #{rebano_fused_basis_forward.1} parent=1 // loop_header_branch
      %16 = sbr.rel (%p14) target = $region8
    $region5: #{rebano_fused_basis_forward.1} parent=1 // loop_body
      %s18 = ssub.s32 %s13, 1
      %s19 = ssub.s32 %s13, 2
      %s20 = sadd.s32 %s13, 1
      %s21 = ssub.s32 %s13, %s20
      %p22 = scmp.eq.s32.totalorder %s21, 0
      %s24 = sadd.s32 %s23, 1
      %s25 = scalar_select %p22, %s23, %s24
      %p28 = pneg %p22
      %p29 = scmp.eq.s32.totalorder %s13, 1
      %p30 = por %p28, %p29
      %p31 = scmp.ne.s32.totalorder %s23, %s26
      %p32 = scmp.eq.s32.totalorder %s13, 0
      %p33 = por %p31, %p32
      %p34 = scmp.ne.s32.totalorder %s23, %s26
      %p35 = scmp.eq.s32.totalorder %s18, 1
      %p36 = por %p34, %p35
      %p37 = scmp.ne.s32.totalorder %s26, %s27
      %p38 = scmp.eq.s32.totalorder %s18, 0
      %p39 = por %p37, %p38
      %p40 = scmp.ne.s32.totalorder %s26, %s27
      %p41 = scmp.eq.s32.totalorder %s19, 1
      %p42 = por %p40, %p41
      %p44 = scmp.ne.s32.totalorder %s27, %s43
      %p45 = scmp.eq.s32.totalorder %s19, 0
      %p46 = por %p44, %p45
      %s48 = sadd.s32 %s47, 1
      %p51 = scmp.eq.s32.totalorder %s13, 1
      %p52 = scmp.ne.s32.totalorder %s47, %s49
      %p53 = scmp.eq.s32.totalorder %s13, 0
      %p54 = por %p52, %p53
      %p55 = scmp.ne.s32.totalorder %s47, %s49
      %p56 = scmp.eq.s32.totalorder %s18, 1
      %p57 = por %p55, %p56
      %p58 = scmp.ne.s32.totalorder %s49, %s50
      %p59 = scmp.eq.s32.totalorder %s18, 0
      %p60 = por %p58, %p59
      %p61 = scmp.ne.s32.totalorder %s49, %s50
      %p62 = scmp.eq.s32.totalorder %s19, 1
      %p63 = por %p61, %p62
      %p65 = scmp.ne.s32.totalorder %s50, %s64
      %p66 = scmp.eq.s32.totalorder %s19, 0
      %p67 = por %p65, %p66
      %s69 = sadd.s32 %s68, 1
      %p72 = scmp.eq.s32.totalorder %s13, 1
      %p73 = scmp.ne.s32.totalorder %s68, %s70
      %p74 = scmp.eq.s32.totalorder %s13, 0
      %p75 = por %p73, %p74
      %p76 = scmp.ne.s32.totalorder %s68, %s70
      %p77 = scmp.eq.s32.totalorder %s18, 1
      %p78 = por %p76, %p77
      %p79 = scmp.ne.s32.totalorder %s70, %s71
      %p80 = scmp.eq.s32.totalorder %s18, 0
      %p81 = por %p79, %p80
      %p82 = scmp.ne.s32.totalorder %s70, %s71
      %p83 = scmp.eq.s32.totalorder %s19, 1
      %p84 = por %p82, %p83
      %p86 = scmp.ne.s32.totalorder %s71, %s85
      %p87 = scmp.eq.s32.totalorder %s19, 0
      %p88 = por %p86, %p87
      %s90 = sadd.s32 %s89, 1
      %p93 = scmp.eq.s32.totalorder %s13, 1
      %p94 = scmp.ne.s32.totalorder %s89, %s91
      %p95 = scmp.eq.s32.totalorder %s13, 0
      %p96 = por %p94, %p95
      %p97 = scmp.ne.s32.totalorder %s89, %s91
      %p98 = scmp.eq.s32.totalorder %s18, 1
      %p99 = por %p97, %p98
      %p100 = scmp.ne.s32.totalorder %s91, %s92
      %p101 = scmp.eq.s32.totalorder %s18, 0
      %p102 = por %p100, %p101
      %p103 = scmp.ne.s32.totalorder %s91, %s92
      %p104 = scmp.eq.s32.totalorder %s19, 1
      %p105 = por %p103, %p104
      %p107 = scmp.ne.s32.totalorder %s92, %s106
      %p108 = scmp.eq.s32.totalorder %s19, 0
      %p109 = por %p107, %p108
      %s110 = ssub.s32 %s13, %s20
      %p111 = scmp.eq.s32.totalorder %s110, 0
      %s113 = sadd.s32 %s112, 1
      %s114 = scalar_select %p111, %s112, %s113
      %p117 = pneg %p111
      %p118 = scmp.eq.s32.totalorder %s13, 1
      %p119 = por %p117, %p118
      %p120 = scmp.ne.s32.totalorder %s112, %s115
      %p121 = scmp.eq.s32.totalorder %s13, 0
      %p122 = por %p120, %p121
      %p123 = scmp.ne.s32.totalorder %s112, %s115
      %p124 = scmp.eq.s32.totalorder %s18, 1
      %p125 = por %p123, %p124
      %p126 = scmp.ne.s32.totalorder %s115, %s116
      %p127 = scmp.eq.s32.totalorder %s18, 0
      %p128 = por %p126, %p127
      %p129 = scmp.ne.s32.totalorder %s115, %s116
      %p130 = scmp.eq.s32.totalorder %s19, 1
      %p131 = por %p129, %p130
      %p133 = scmp.ne.s32.totalorder %s116, %s132
      %p134 = scmp.eq.s32.totalorder %s19, 0
      %p135 = por %p133, %p134
      %p136 = scmp.le.s32.totalorder 1, %s13
      %p137 = scmp.lt.s32.totalorder %s13, 3
      %p138 = pnand %p136, %p137
      %p139 = pneg %p138
      // Predicated region
      $region9: #{rebano_fused_basis_forward.1} parent=5 // pred_check
        _
      $region10: #{rebano_fused_basis_forward.1} parent=5 // pred_check_branch
        %141 = sbr.rel (%p138) target = $region12
      $region11: #{rebano_fused_basis_forward.1} parent=5 // pred_region
        %s142 = ssub.s32 %s13, 1
        // Predicated region
        $region13: #{rebano_fused_basis_forward.1} parent=11 // pred_check
          %p143 = pneg %p60
        $region14: #{rebano_fused_basis_forward.1} parent=11 // pred_check_branch
          %145 = sbr.rel (%p143) target = $region16
        $region15: #{rebano_fused_basis_forward.1} parent=11 // pred_region
          _
        $region16: #{rebano_fused_basis_forward.1} parent=11 // pred_fallthru
          _
        // Predicated region
        $region17: #{rebano_fused_basis_forward.1} parent=11 // pred_check
          %p146 = pneg %p81
        $region18: #{rebano_fused_basis_forward.1} parent=11 // pred_check_branch
          %148 = sbr.rel (%p146) target = $region20
        $region19: #{rebano_fused_basis_forward.1} parent=11 // pred_region
          _
        $region20: #{rebano_fused_basis_forward.1} parent=11 // pred_fallthru
          _
        // Predicated region
        $region21: #{rebano_fused_basis_forward.1} parent=11 // pred_check
          %p149 = pneg %p102
        $region22: #{rebano_fused_basis_forward.1} parent=11 // pred_check_branch
          %151 = sbr.rel (%p149) target = $region24
        $region23: #{rebano_fused_basis_forward.1} parent=11 // pred_region
          _
        $region24: #{rebano_fused_basis_forward.1} parent=11 // pred_fallthru
          _
      $region12: #{rebano_fused_basis_forward.1} parent=5 // pred_fallthru
        _
      %p152 = scmp.lt.s32.totalorder %s13, 2
      // Predicated region
      $region25: #{rebano_fused_basis_forward.1} parent=5 // pred_check
        %p153 = pneg %p152
      $region26: #{rebano_fused_basis_forward.1} parent=5 // pred_check_branch
        %155 = sbr.rel (%p153) target = $region28
      $region27: #{rebano_fused_basis_forward.1} parent=5 // pred_region
        // Predicated region
        $region29: #{rebano_fused_basis_forward.1} parent=27 // pred_check
          %p156 = pneg %p33
        $region30: #{rebano_fused_basis_forward.1} parent=27 // pred_check_branch
          %158 = sbr.rel (%p156) target = $region32
        $region31: #{rebano_fused_basis_forward.1} parent=27 // pred_region
          %s159 = smul.u32 6, %s13
          %p160 = scmp.lt.s32.totalorder %s159, 11
          %s161 = scalar_select %p160, %s159, 11
          %s162 = scalar_lea.vmem %s0, %s161
          %s163 = smul.u32 6, %s13
        $region32: #{rebano_fused_basis_forward.1} parent=27 // pred_fallthru
          _
      $region28: #{rebano_fused_basis_forward.1} parent=5 // pred_fallthru
        _
      %p164 = scmp.le.s32.totalorder 1, %s13
      %p165 = scmp.lt.s32.totalorder %s13, 3
      %p166 = pnand %p164, %p165
      %p167 = pneg %p166
      // Predicated region
      $region33: #{rebano_fused_basis_forward.1} parent=5 // pred_check
        _
      $region34: #{rebano_fused_basis_forward.1} parent=5 // pred_check_branch
        %169 = sbr.rel (%p166) target = $region36
      $region35: #{rebano_fused_basis_forward.1} parent=5 // pred_region
        %s170 = ssub.s32 %s13, 1
        %s171 = smul.u32 6, %s18
        %p172 = scmp.lt.s32.totalorder %s171, 11
        %s173 = scalar_select %p172, %s171, 11
        %s174 = scalar_lea.vmem %s0, %s173
        %p175 = pneg %p39
        %p176 = pneg %p36
        %p177 = pneg %p60
        %p178 = pneg %p57
        %p179 = pneg %p81
        %p180 = pneg %p78
        %p181 = pneg %p102
        %p182 = pneg %p99
        %p183 = pneg %p128
        %p184 = pneg %p125
        %s185 = sand.u32 %s115, 1
        %s186 = scalar_lea.sflag [#allocation3], %s185
        %s187 = sand.u32 %s115, 1
        %s188 = smul.addr %s187, 6
        %s189 = scalar_lea.vmem [#allocation2], %s188
        %s190 = smul.u32 6, %s18
        %p191 = scmp.lt.s32.totalorder %s190, 11
        %s192 = scalar_select %p191, %s190, 11
        %s193 = scalar_lea.vmem %s0, %s192
        %s194 = smul.u32 6, %s18
        %s195 = smul.u32 6, %s18
        %v196 = vld [vmem:[%s193] sm:$0x3f]
        %v197 = vld [vmem:[%s2] sm:$0xff]
        %v198 = vld [vmem:[%s3] sm:$0xff]
        %v199 = vld [vmem:[%s1] sm:$0xff]
        %v201 = vlaneseq
        %v202 = vshrl.u32 %v201, 7
        %v203 = vsub.s32 0, %v202
        %v204 = vrot.slane %v196, %v203
        %v205 = vlaneseq
        %v206 = vshrl.u32 %v205, 7
        %v207 = vsub.s32 1, %v206
        %v208 = vrot.slane %v196, %v207
        %v209 = vlaneseq
        %v210 = vshrl.u32 %v209, 7
        %v211 = vsub.s32 2, %v210
        %v212 = vrot.slane %v196, %v211
        %v213 = vlaneseq
        %v214 = vshrl.u32 %v213, 7
        %v215 = vsub.s32 3, %v214
        %v216 = vrot.slane %v196, %v215
        %v217 = vlaneseq
        %v218 = vshrl.u32 %v217, 7
        %v219 = vsub.s32 4, %v218
        %v220 = vrot.slane %v196, %v219
        %v221 = vlaneseq
        %v222 = vshrl.u32 %v221, 7
        %v223 = vsub.s32 5, %v222
        %v224 = vrot.slane %v196, %v223
        %232 = vset.pattern.permute.xlu0 0
        %233 = vperm.xlu0 %232, %v197
        %v234 = vpop.permute.xlu0 %233
        %v236 = vmul.f32 %v234, %v204
        %v237 = vmul.f32 %v234, %v208
        %v238 = vmul.f32 %v234, %v212
        %v239 = vmul.f32 %v234, %v216
        %v240 = vmul.f32 %v234, %v220
        %v241 = vmul.f32 %v234, %v224
        %243 = vset.pattern.permute.xlu0 0
        %244 = vperm.xlu0 %243, %v198
        %v245 = vpop.permute.xlu0 %244
        %v247 = vadd.f32 %v236, %v245
        %v248 = vadd.f32 %v237, %v245
        %v249 = vadd.f32 %v238, %v245
        %v250 = vadd.f32 %v239, %v245
        %v251 = vadd.f32 %v240, %v245
        %v252 = vadd.f32 %v241, %v245
        %v253 = vtanh.pop %v247
        %v254 = vtanh.pop %v248
        %v255 = vtanh.pop %v249
        %v256 = vtanh.pop %v250
        %v257 = vtanh.pop %v251
        %v258 = vtanh.pop %v252
        %260 = vset.pattern.permute.xlu0 0
        %261 = vperm.xlu0 %260, %v199
        %v262 = vpop.permute.xlu0 %261
        %v264 = vmul.f32 %v253, %v262
        %v265 = vmul.f32 %v254, %v262
        %v266 = vmul.f32 %v255, %v262
        %v267 = vmul.f32 %v256, %v262
        %v268 = vmul.f32 %v257, %v262
        %v269 = vmul.f32 %v258, %v262
        %v270 = vrot.slane %v264, 4
        %v271 = vadd.f32 %v264, %v270
        %v272 = vrot.slane %v271, 2
        %v273 = vadd.f32 %v271, %v272
        %v274 = vrot.slane %v273, 1
        %v275 = vadd.f32 %v273, %v274
        %v276 = vrot.slane %v265, 4
        %v277 = vadd.f32 %v265, %v276
        %v278 = vrot.slane %v277, 2
        %v279 = vadd.f32 %v277, %v278
        %v280 = vrot.slane %v279, 1
        %v281 = vadd.f32 %v279, %v280
        %v282 = vrot.slane %v266, 4
        %v283 = vadd.f32 %v266, %v282
        %v284 = vrot.slane %v283, 2
        %v285 = vadd.f32 %v283, %v284
        %v286 = vrot.slane %v285, 1
        %v287 = vadd.f32 %v285, %v286
        %v288 = vrot.slane %v267, 4
        %v289 = vadd.f32 %v267, %v288
        %v290 = vrot.slane %v289, 2
        %v291 = vadd.f32 %v289, %v290
        %v292 = vrot.slane %v291, 1
        %v293 = vadd.f32 %v291, %v292
        %v294 = vrot.slane %v268, 4
        %v295 = vadd.f32 %v268, %v294
        %v296 = vrot.slane %v295, 2
        %v297 = vadd.f32 %v295, %v296
        %v298 = vrot.slane %v297, 1
        %v299 = vadd.f32 %v297, %v298
        %v300 = vrot.slane %v269, 4
        %v301 = vadd.f32 %v269, %v300
        %v302 = vrot.slane %v301, 2
        %v303 = vadd.f32 %v301, %v302
        %v304 = vrot.slane %v303, 1
        %v305 = vadd.f32 %v303, %v304
        %v312 = vcombine.low %v275, %v281
        %v313 = vcombine.low %v287, %v293
        %v314 = vcombine.low %v299, %v305
        %v316 = vunpack.c.l.s4 1966171168
        %v317 = vunpack.c.0.s8 %v316
        %v318 = vlaneseq
        %v319 = vshrl.u32 %v318, 7
        %v320 = vsub.s32 %v317, %v319
        %v321 = vrot.slane %v312, %v320
        %v323 = vunpack.c.l.s4 1966171168
        %v324 = vunpack.c.0.s8 %v323
        %v325 = vlaneseq
        %v326 = vshrl.u32 %v325, 7
        %v327 = vsub.s32 %v324, %v326
        %v328 = vrot.slane %v313, %v327
        %v330 = vunpack.c.l.s4 1966171168
        %v331 = vunpack.c.0.s8 %v330
        %v332 = vlaneseq
        %v333 = vshrl.u32 %v332, 7
        %v334 = vsub.s32 %v331, %v333
        %v335 = vrot.slane %v314, %v334
        %v336 = vcombine.low %v321, %v328
        %v338 = vunpack.c.l.s4 1966171168
        %v339 = vunpack.c.0.s8 %v338
        %v340 = vlaneseq
        %v341 = vshrl.u32 %v340, 7
        %v342 = vsub.s32 %v339, %v341
        %v343 = vrot.slane %v336, %v342
        %v345 = vunpack.c.l.s4 1966171168
        %v346 = vunpack.c.0.s8 %v345
        %v347 = vlaneseq
        %v348 = vshrl.u32 %v347, 7
        %v349 = vsub.s32 %v346, %v348
        %v350 = vrot.slane %v335, %v349
        %v351 = vcombine.low %v343, %v350
        %v353 = vlaneseq
        %vm354 = vcmp.ge.s32.totalorder %v353, 0
        %vm355 = vcmp.lt.s32.totalorder %v353, 768
        %vm356 = vmand %vm354, %vm355
        %357 = vst.msk [vmem:[%s189] sm:$0x3f] %vm356, %v351
        %s358 = sand.u32 %s115, 1
        %s359 = scalar_lea.sflag [#allocation3], %s358
        %s360 = sand.u32 %s115, 1
        %s361 = smul.addr %s360, 6
        %s362 = scalar_lea.vmem [#allocation2], %s361
        // Predicated region
        $region37: #{rebano_fused_basis_forward.1} parent=35 // pred_check
          %p363 = pneg %p125
        $region38: #{rebano_fused_basis_forward.1} parent=35 // pred_check_branch
          %365 = sbr.rel (%p363) target = $region40
        $region39: #{rebano_fused_basis_forward.1} parent=35 // pred_region
          %s366 = smul.u32 6, %s18
          %s368 = ssub.s32 96, 96
          %369 = vsyncadd %s359, %s368
          %s370 = smul.addr %s366, 16
          %s371 = scalar_lea.hbm %s4, %s370
          %s373 = sshll.u32 %s362, 4
          %s374 = int_to_ptr.vmem [resolvable:$true] %s373
          %376 = dma.vmem_to_hbm [thread:$0]  %s374, 96, %s371, %s359
        $region40: #{rebano_fused_basis_forward.1} parent=35 // pred_fallthru
          _
      $region36: #{rebano_fused_basis_forward.1} parent=5 // pred_fallthru
        _
      %p377 = scmp.le.s32.totalorder 2, %s13
      // Predicated region
      $region41: #{rebano_fused_basis_forward.1} parent=5 // pred_check
        %p378 = pneg %p377
      $region42: #{rebano_fused_basis_forward.1} parent=5 // pred_check_branch
        %380 = sbr.rel (%p378) target = $region44
      $region43: #{rebano_fused_basis_forward.1} parent=5 // pred_region
        %s381 = ssub.s32 %s13, 2
        // Predicated region
        $region45: #{rebano_fused_basis_forward.1} parent=43 // pred_check
          %p382 = pneg %p131
        $region46: #{rebano_fused_basis_forward.1} parent=43 // pred_check_branch
          %384 = sbr.rel (%p382) target = $region48
        $region47: #{rebano_fused_basis_forward.1} parent=43 // pred_region
          %s385 = sand.u32 %s116, 1
          %s386 = scalar_lea.sflag [#allocation3], %s385
          %s387 = sand.u32 %s116, 1
          %s388 = smul.addr %s387, 6
          %s389 = scalar_lea.vmem [#allocation2], %s388
          %390 = dma.done %s386, 96
        $region48: #{rebano_fused_basis_forward.1} parent=43 // pred_fallthru
          _
      $region44: #{rebano_fused_basis_forward.1} parent=5 // pred_fallthru
        _
    $region6: #{rebano_fused_basis_forward.1} parent=1 // loop_footer
      %s17 = sadd.s32 1, %s13
    $region7: #{rebano_fused_basis_forward.1} parent=1 // loop_footer_branch
      %12 = sbr.rel target = $region3
    $region8: #{rebano_fused_basis_forward.1} parent=1 // loop_exit
      _
    %391 = vsyncpa [#allocation3], 1
    %s392 = scalar_lea.sflag [#allocation3], 1
    %393 = vsyncpa %s392, 1

</llo_original>
